<compile_context>
chip_gen: v5e
topology: v5e:2x2
jax: 0.10.0
libtpu: 0.0.40
codegen_flags: <defaults>
</compile_context>

<pallas_src>
import jax
import jax.numpy as jnp
from jax.experimental import pallas as pl
from jax.experimental.pallas import tpu as pltpu


def _round_up(x, m):
    return ((x + m - 1) // m) * m


# ----------------------------------------------------------------------------
# Kernel: one row-tile of   y = x @ W_t + b
#   x_ref: (TM, K)   w_ref: (K, N)   b_ref: (1, N) f32   o_ref: (TM, N) f32
# Single MXU matmul (f32 accumulate) + VPU bias add; everything stays in vregs.
# ----------------------------------------------------------------------------
def _gate_linear_kernel(x_ref, w_ref, b_ref, o_ref):
    acc = jnp.dot(x_ref[...], w_ref[...], preferred_element_type=jnp.float32)
    o_ref[...] = (acc + b_ref[...]).astype(o_ref.dtype)


def prepare_gate_params(params, compute_dtype=jnp.bfloat16):
    """One-time prep (hoisted out of the forward path):
    transpose W (N, K) -> (K, N), cast to the MXU input dtype, keep bias f32."""
    w = jnp.asarray(params["weight"])        # (N, K)  PyTorch layout
    b = jnp.asarray(params["bias"])          # (N,)
    return {
        "w_t": w.T.astype(compute_dtype),                      # (K, N)
        "bias": b.astype(jnp.float32).reshape(1, -1),          # (1, N)
        "compute_dtype": compute_dtype,
    }


def gate_forward(prepared, x, *, tm_max=2048):
    """PyTorch nn.Linear forward on the last dim of x:  y = x @ W.T + b."""
    w_t = prepared["w_t"]                    # (K, N)
    b_p = prepared["bias"]                   # (1, N) f32
    cdt = prepared["compute_dtype"]
    K, N = w_t.shape
    lead = x.shape[:-1]
    assert x.shape[-1] == K, "last dim of x must equal Linear input_size"

    M = 1
    for d in lead:
        M *= d
    x2 = x.reshape(M, K).astype(cdt)

    # Row tiling only; K stays un-tiled (weights VMEM-resident, one MXU pass
    # per row tile).  Big tiles amortize the ~0.35 us per-grid-step overhead.
    TM = min(_round_up(max(M, 1), 8), tm_max)
    grid_m = pl.cdiv(M, TM)

    in_bytes = jnp.dtype(cdt).itemsize
    cost = pl.CostEstimate(
        flops=2 * M * K * N,
        transcendentals=0,
        bytes_accessed=in_bytes * (M * K + K * N) + 4 * (N + M * N),
    )

    out = pl.pallas_call(
        _gate_linear_kernel,
        out_shape=jax.ShapeDtypeStruct((M, N), jnp.float32),
        grid=(grid_m,),
        in_specs=[
            pl.BlockSpec((TM, K), lambda i: (i, 0)),   # row tile of x
            pl.BlockSpec((K, N), lambda i: (0, 0)),    # full weight, resident
            pl.BlockSpec((1, N), lambda i: (0, 0)),    # full bias, resident
        ],
        out_specs=pl.BlockSpec((TM, N), lambda i: (i, 0)),
        compiler_params=pltpu.CompilerParams(
            dimension_semantics=("parallel",),         # row tiles independent
        ),
        cost_estimate=cost,
    )(x2, w_t, b_p)

    return out.reshape(*lead, N)


# ----------------------------------------------------------------------------
# Deterministic parameter construction + pure-JAX reference.
# ----------------------------------------------------------------------------
def make_gate_params(key, input_size, output_size):
    kw, kb = jax.random.split(key)
    w = jax.random.normal(kw, (output_size, input_size), jnp.float32) * 0.05
    b = jax.random.normal(kb, (output_size,), jnp.float32) * 0.05
    return {"weight": w, "bias": b}


def gate_forward_ref(params, x):
    return x @ params["weight"].T + params["bias"]


if __name__ == "__main__":
    key = jax.random.PRNGKey(0)
    k_params, k_x1, k_x2 = jax.random.split(key, 3)

    # Shapes consistent with how Gate is used in the CGC framework:
    # Gate(input_size=128, output_size=2*num_experts) applied to (B, 1, 128).
    input_size, output_size = 128, 6
    B = 4
    params = make_gate_params(k_params, input_size, output_size)

    # 1) f32 compute path: tight numerical check against the reference.
    prep_f32 = prepare_gate_params(params, compute_dtype=jnp.float32)
    x = jax.random.normal(k_x1, (B, 1, input_size), jnp.float32)
    y = jax.block_until_ready(gate_forward(prep_f32, x))
    ref = gate_forward_ref(params, x)
    assert y.shape == (B, 1, output_size)
    assert jnp.allclose(y, ref, atol=1e-4, rtol=1e-4)

    # 2) default bf16 MXU path, 2-D input, ragged last row tile + 2-step grid.
    prep_bf16 = prepare_gate_params(params)           # bf16 weights, once
    x_big = jax.random.normal(k_x2, (20, input_size), jnp.float32)
    y_big = jax.block_until_ready(gate_forward(prep_bf16, x_big, tm_max=16))
    ref_big = gate_forward_ref(params, x_big)
    assert y_big.shape == (20, output_size)
    assert jnp.allclose(y_big, ref_big, atol=2e-2, rtol=2e-2)

    print("KERNEL_OK")
</pallas_src>

<mosaic_0001>
module attributes {stable_mosaic.version = 11 : i64} {
  func.func @_gate_linear_kernel(%arg0: i32, %arg1: memref<8x128xf32, #tpu.memory_space<vmem>>, %arg2: memref<128x6xf32, #tpu.memory_space<vmem>>, %arg3: memref<1x6xf32, #tpu.memory_space<vmem>>, %arg4: memref<8x6xf32, #tpu.memory_space<vmem>>) attributes {dimension_semantics = [#tpu.dimension_semantics<parallel>], iteration_bounds = array<i64: 1>, scalar_prefetch = 0 : i64, scratch_operands = 0 : i64, tpu.core_type = #tpu.core_type<tc>, window_params = [{transform_indices = @transform_0, window_bounds = array<i64: 8, 128>}, {pipeline_mode = #tpu.pipeline_mode<synchronous>, transform_indices = @transform_1, window_bounds = array<i64: 128, 6>}, {pipeline_mode = #tpu.pipeline_mode<synchronous>, transform_indices = @transform_2, window_bounds = array<i64: 1, 6>}, {transform_indices = @transform_3, window_bounds = array<i64: 8, 6>}]} {
    %c0 = arith.constant 0 : index
    %c0_0 = arith.constant 0 : index
    %0 = vector.load %arg1[%c0, %c0_0] : memref<8x128xf32, #tpu.memory_space<vmem>>, vector<8x128xf32>
    %c0_1 = arith.constant 0 : index
    %c0_2 = arith.constant 0 : index
    %1 = vector.load %arg2[%c0_1, %c0_2] : memref<128x6xf32, #tpu.memory_space<vmem>>, vector<128x6xf32>
    %cst = arith.constant dense<0.000000e+00> : vector<8x6xf32>
    %2 = tpu.matmul %0, %1, %cst {dimension_numbers = #tpu.dot_dimension_numbers<[1], [0], [0], [1], [0, 0, 1, 1], [], []>} : vector<8x128xf32>, vector<128x6xf32>, vector<8x6xf32> -> vector<8x6xf32>
    %c0_3 = arith.constant 0 : index
    %c0_4 = arith.constant 0 : index
    %3 = vector.load %arg3[%c0_3, %c0_4] : memref<1x6xf32, #tpu.memory_space<vmem>>, vector<1x6xf32>
    %4 = vector.broadcast %3 : vector<1x6xf32> to vector<8x6xf32>
    %5 = arith.addf %2, %4 : vector<8x6xf32>
    %c0_5 = arith.constant 0 : index
    %c0_6 = arith.constant 0 : index
    %6 = vector.load %arg4[%c0_5, %c0_6] : memref<8x6xf32, #tpu.memory_space<vmem>>, vector<8x6xf32>
    tpu.vector_store %arg4[%c0_5, %c0_6], %5 {strides = array<i32>} : memref<8x6xf32, #tpu.memory_space<vmem>>, vector<8x6xf32>,
    return
  }
  func.func @transform_0(%arg0: i32) -> (i32, i32) {
    %c0_i32 = arith.constant 0 : i32
    %c0_i32_0 = arith.constant 0 : i32
    return %arg0, %c0_i32 : i32, i32
  }
  func.func @transform_1(%arg0: i32) -> (i32, i32) {
    %c0_i32 = arith.constant 0 : i32
    %c0_i32_0 = arith.constant 0 : i32
    %c0_i32_1 = arith.constant 0 : i32
    return %c0_i32, %c0_i32_0 : i32, i32
  }
  func.func @transform_2(%arg0: i32) -> (i32, i32) {
    %c0_i32 = arith.constant 0 : i32
    %c0_i32_0 = arith.constant 0 : i32
    %c0_i32_1 = arith.constant 0 : i32
    return %c0_i32, %c0_i32_0 : i32, i32
  }
  func.func @transform_3(%arg0: i32) -> (i32, i32) {
    %c0_i32 = arith.constant 0 : i32
    %c0_i32_0 = arith.constant 0 : i32
    return %arg0, %c0_i32 : i32, i32
  }
}

</mosaic_0001>

<llo_original>
// kernel: tpu_custom_call.1
$region0: #{tpu_custom_call.1}
  #allocation0 [shape = 'u32[]', space=smem, size = 0x4, offset = 0x4, fixed_abs, tag = 'smem constant byte address 0x4 - core index']
  #allocation1 [shape = 'u32[72,128]{1,0:T(1,128)}', space=vmem, size = 0x9000, scoped, tag = 'internal scratch']
  %s0 = inlined_call_operand.vmem [shape: f32[4,128], index: 0, kind: input, shape index: {}]
  %s1 = inlined_call_operand.vmem [shape: f32[128,6], index: 1, kind: input, shape index: {}]
  %s2 = inlined_call_operand.vmem [shape: f32[1,6], index: 2, kind: input, shape index: {}]
  %s3 = inlined_call_operand.hbm [shape: f32[4,6], index: 3, kind: output, shape index: {}]
  %s4 = sld [smem:[#allocation0]]
  $region22: #{tpu_custom_call.1} parent=0
    _
  %s6 = ssub.s32 1, %s4
  %s7 = scalar_select 0, %s6, %s4
  $region1: #{tpu_custom_call.1} parent=0
    #allocation2 [shape = 'u8[4096]{0}', space=vmem, size = 0x1000, scoped, tag = 'output window, operand 0, single buffered']
    #allocation3 [shape = 's32[1]{0}', space=sflag, size = 0x4, scoped, tag = 'scoped memory for tpu_custom_call.1']
    %8 = vsyncpa [#allocation3], 0
    // Predicated region
    $region2: #{tpu_custom_call.1} parent=1 // pred_check
      _
    $region3: #{tpu_custom_call.1} parent=1 // pred_check_branch
      %10 = sbr.rel (0) target = $region5
    $region4: #{tpu_custom_call.1} parent=1 // pred_region
      _
    $region5: #{tpu_custom_call.1} parent=1 // pred_fallthru
      _
    // Predicated region
    $region6: #{tpu_custom_call.1} parent=1 // pred_check
      _
    $region7: #{tpu_custom_call.1} parent=1 // pred_check_branch
      %12 = sbr.rel (0) target = $region9
    $region8: #{tpu_custom_call.1} parent=1 // pred_region
      _
    $region9: #{tpu_custom_call.1} parent=1 // pred_fallthru
      _
    // Predicated region
    $region10: #{tpu_custom_call.1} parent=1 // pred_check
      _
    $region11: #{tpu_custom_call.1} parent=1 // pred_check_branch
      %14 = sbr.rel (0) target = $region13
    $region12: #{tpu_custom_call.1} parent=1 // pred_region
      _
    $region13: #{tpu_custom_call.1} parent=1 // pred_fallthru
      _
    %v15 = vld [vmem:[%s0] sm:$0xff]
    %v16 = vld [vmem:[%s1] sm:$0xff]
    %v17 = vld [vmem:[%s1 + $0x8] sm:$0xff]
    %v18 = vld [vmem:[%s1 + $0x10] sm:$0xff]
    %v19 = vld [vmem:[%s1 + $0x18] sm:$0xff]
    %v20 = vld [vmem:[%s1 + $0x20] sm:$0xff]
    %v21 = vld [vmem:[%s1 + $0x28] sm:$0xff]
    %v22 = vld [vmem:[%s1 + $0x30] sm:$0xff]
    %v23 = vld [vmem:[%s1 + $0x38] sm:$0xff]
    %v24 = vld [vmem:[%s1 + $0x40] sm:$0xff]
    %v25 = vld [vmem:[%s1 + $0x48] sm:$0xff]
    %v26 = vld [vmem:[%s1 + $0x50] sm:$0xff]
    %v27 = vld [vmem:[%s1 + $0x58] sm:$0xff]
    %v28 = vld [vmem:[%s1 + $0x60] sm:$0xff]
    %v29 = vld [vmem:[%s1 + $0x68] sm:$0xff]
    %v30 = vld [vmem:[%s1 + $0x70] sm:$0xff]
    %v31 = vld [vmem:[%s1 + $0x78] sm:$0xff]
    %v32 = vld [vmem:[%s2] sm:$0x1]
    %v34 = vperm.slane %v32, 0
    %36 = vmatpush.msra.mxu0 %v31
    %37 = vmatpush.msra.mxu0 %v30
    %38 = vmatpush.msra.mxu0 %v29
    %39 = vmatpush.msra.mxu0 %v28
    %40 = vmatpush.msra.mxu0 %v27
    %41 = vmatpush.msra.mxu0 %v26
    %42 = vmatpush.msra.mxu0 %v25
    %43 = vmatpush.msra.mxu0 %v24
    %44 = vmatpush.msra.mxu0 %v23
    %45 = vmatpush.msra.mxu0 %v22
    %46 = vmatpush.msra.mxu0 %v21
    %47 = vmatpush.msra.mxu0 %v20
    %48 = vmatpush.msra.mxu0 %v19
    %49 = vmatpush.msra.mxu0 %v18
    %50 = vmatpush.msra.mxu0 %v17
    %51 = vmatpush.msra.mxu0 %v16
    %52 = vmatmul.f32.gmra.mxu0 %v15
    %v53 = vpop.f32.mrf.mxu0
    %v54 = vadd.f32 %v34, %v53
    %55 = vdwg.mxu0
    %vm56 = vcmask 48128
    %57 = vst.msk [vmem:[#allocation2] sm:$0xff] %vm56, %v54
    // Predicated region
    $region14: #{tpu_custom_call.1} parent=1 // pred_check
      _
    $region15: #{tpu_custom_call.1} parent=1 // pred_check_branch
      %59 = sbr.rel (0) target = $region17
    $region16: #{tpu_custom_call.1} parent=1 // pred_region
      %61 = vsyncadd [#allocation3], 64
      %s62 = sshll.u32 [#allocation2], 4
      %s63 = int_to_ptr.vmem [resolvable:$true] %s62
      %s64 = sshll.u32 %s3, 4
      %s65 = int_to_ptr.hbm [resolvable:$true] %s64
      %70 = dma.vmem_to_hbm [thread:$0]  %s63, 64, %s65, [#allocation3], 64, 64, 4
    $region17: #{tpu_custom_call.1} parent=1 // pred_fallthru
      _
    // Predicated region
    $region18: #{tpu_custom_call.1} parent=1 // pred_check
      _
    $region19: #{tpu_custom_call.1} parent=1 // pred_check_branch
      %72 = sbr.rel (0) target = $region21
    $region20: #{tpu_custom_call.1} parent=1 // pred_region
      %74 = dma.done [#allocation3], 128
    $region21: #{tpu_custom_call.1} parent=1 // pred_fallthru
      _
    %75 = vsyncpa [#allocation3], 1

</llo_original>
